<compile_context>
chip_gen: v6e
topology: v6e:2x2x1
jax: 0.10.0
libtpu: 0.0.40
codegen_flags: <defaults>
</compile_context>

<pallas_src>
import math

import jax
import jax.numpy as jnp
from jax.experimental import pallas as pl
from jax.experimental.pallas import tpu as pltpu

IN_FEATURES = 536
K_PAD = 640                      # 5 * 128 lanes
H1, H2, H3, OUT = 256, 128, 64, 1
DEFAULT_TILE_B = 1024            # MXU-aligned (multiple of 256); ~3 MiB VMEM/tile


def _round_up(n, m):
    return ((n + m - 1) // m) * m


def domain_classifier_kernel(
    x_ref,
    w1_ref, b1_ref,
    w2_ref, b2_ref,
    w3_ref, b3_ref,
    w4_ref, b4_ref,
    o_ref,
):
    # lin_1 + ReLU (dropout_1 is identity at inference). bf16 MXU, f32 accumulate.
    h = jnp.dot(x_ref[...], w1_ref[...], preferred_element_type=jnp.float32)
    h = jnp.maximum(h + b1_ref[...], 0.0).astype(jnp.bfloat16)
    # lin_2 + ReLU (dropout_2 identity)
    h = jnp.dot(h, w2_ref[...], preferred_element_type=jnp.float32)
    h = jnp.maximum(h + b2_ref[...], 0.0).astype(jnp.bfloat16)
    # lin_3 + ReLU (dropout_3 identity); kept in f32 for the VPU final layer.
    h = jnp.dot(h, w3_ref[...], preferred_element_type=jnp.float32)
    h = jnp.maximum(h + b3_ref[...], 0.0)
    # output_layer (64 -> 1): VPU multiply + lane reduction instead of an N=1
    # MXU matmul (a full MXU pass for one useful column).
    out = jnp.sum(h * w4_ref[...].astype(jnp.float32), axis=-1, keepdims=True)
    o_ref[...] = (out + b4_ref[...]).astype(o_ref.dtype)


def domain_classifier_forward(x, params, tile_b=DEFAULT_TILE_B):
    """x: (B, 536) float array. Returns (B, 1) float32 logits (eval-mode forward)."""
    (w1, b1), (w2, b2), (w3, b3), (w4, b4) = params
    B, K = x.shape
    assert K == IN_FEATURES, K

    # Batch tile: multiple of 16 (bf16 sublane packing), capped at tile_b.
    tb = min(_round_up(tile_b, 16), _round_up(B, 16))
    b_pad = _round_up(B, tb)
    grid = (b_pad // tb,)

    # One-time host-side layout prep: bf16 cast + zero-pad K 536 -> 640 and B -> b_pad.
    x_p = jnp.pad(x.astype(jnp.bfloat16), ((0, b_pad - B), (0, K_PAD - K)))
    w1_p = jnp.pad(w1.astype(jnp.bfloat16), ((0, K_PAD - K), (0, 0)))
    w2_p = w2.astype(jnp.bfloat16)
    w3_p = w3.astype(jnp.bfloat16)
    w4_row = w4.astype(jnp.bfloat16).reshape(1, H3)      # (1, 64) for VPU broadcast
    b1_p = b1.astype(jnp.float32)
    b2_p = b2.astype(jnp.float32)
    b3_p = b3.astype(jnp.float32)
    b4_p = b4.astype(jnp.float32).reshape(1, 1)

    def const(i):  # weights/biases: same block every grid step -> stay VMEM-resident
        return (0, 0)

    flops = 2 * b_pad * (K_PAD * H1 + H1 * H2 + H2 * H3 + H3)
    param_bytes = 2 * (K_PAD * H1 + H1 * H2 + H2 * H3 + H3) + 4 * (H1 + H2 + H3 + 1)
    bytes_accessed = b_pad * K_PAD * 2 + b_pad * 4 + param_bytes

    out = pl.pallas_call(
        domain_classifier_kernel,
        out_shape=jax.ShapeDtypeStruct((b_pad, OUT), jnp.float32),
        grid=grid,
        in_specs=[
            pl.BlockSpec((tb, K_PAD), lambda i: (i, 0)),     # x: streamed per tile
            pl.BlockSpec((K_PAD, H1), const), pl.BlockSpec((1, H1), const),
            pl.BlockSpec((H1, H2), const),    pl.BlockSpec((1, H2), const),
            pl.BlockSpec((H2, H3), const),    pl.BlockSpec((1, H3), const),
            pl.BlockSpec((1, H3), const),     pl.BlockSpec((1, 1), const),
        ],
        out_specs=pl.BlockSpec((tb, OUT), lambda i: (i, 0)),
        compiler_params=pltpu.CompilerParams(
            dimension_semantics=("parallel",)),
        cost_estimate=pl.CostEstimate(
            flops=flops, transcendentals=0, bytes_accessed=bytes_accessed),
    )(x_p, w1_p, b1_p, w2_p, b2_p, w3_p, b3_p, w4_row, b4_p)

    return out[:B]


def _init_linear(key, fan_in, fan_out):
    """Mimics torch.nn.Linear default init (U[-1/sqrt(fan_in), 1/sqrt(fan_in)]).

    Weight stored transposed relative to PyTorch: (fan_in, fan_out). Bias (1, fan_out).
    """
    kw, kb = jax.random.split(key)
    bound = 1.0 / math.sqrt(fan_in)
    w = jax.random.uniform(kw, (fan_in, fan_out), jnp.float32, -bound, bound)
    b = jax.random.uniform(kb, (1, fan_out), jnp.float32, -bound, bound)
    return w, b


def make_params(key):
    k1, k2, k3, k4 = jax.random.split(key, 4)
    return (
        _init_linear(k1, IN_FEATURES, H1),
        _init_linear(k2, H1, H2),
        _init_linear(k3, H2, H3),
        _init_linear(k4, H3, OUT),
    )


def reference_forward_f32(x, params):
    """Plain-JAX f32 reference of the forward pass (dropout = identity)."""
    h = x
    for i, (w, b) in enumerate(params):
        h = h @ w + b
        if i < len(params) - 1:
            h = jnp.maximum(h, 0.0)
    return h


def reference_forward_bf16(x, params):
    """Plain-JAX reference mimicking the kernel's numerics (bf16 in, f32 accumulate)."""
    (w1, b1), (w2, b2), (w3, b3), (w4, b4) = params
    h = jnp.dot(x.astype(jnp.bfloat16), w1.astype(jnp.bfloat16),
                preferred_element_type=jnp.float32)
    h = jnp.maximum(h + b1, 0.0).astype(jnp.bfloat16)
    h = jnp.dot(h, w2.astype(jnp.bfloat16), preferred_element_type=jnp.float32)
    h = jnp.maximum(h + b2, 0.0).astype(jnp.bfloat16)
    h = jnp.dot(h, w3.astype(jnp.bfloat16), preferred_element_type=jnp.float32)
    h = jnp.maximum(h + b3, 0.0)
    w4_row = w4.astype(jnp.bfloat16).astype(jnp.float32).reshape(1, H3)
    out = jnp.sum(h * w4_row, axis=-1, keepdims=True)
    return out + b4


if __name__ == "__main__":
    key = jax.random.PRNGKey(0)
    k_params, k_x = jax.random.split(key)

    params = make_params(k_params)
    B = 8
    x = jax.random.normal(k_x, (B, IN_FEATURES), jnp.float32)

    out = domain_classifier_forward(x, params)
    out = jax.block_until_ready(out)
    assert out.shape == (B, OUT), out.shape

    ref_bf16 = reference_forward_bf16(x, params)   # same numerics as the kernel
    ref_f32 = reference_forward_f32(x, params)     # full-precision sanity check
    assert jnp.allclose(out, ref_bf16, atol=1e-2, rtol=1e-2), (
        f"bf16-ref max abs err = {jnp.max(jnp.abs(out - ref_bf16))}"
    )
    assert jnp.allclose(out, ref_f32, atol=6e-2, rtol=6e-2), (
        f"f32-ref max abs err = {jnp.max(jnp.abs(out - ref_f32))}"
    )

    print("KERNEL_OK")
</pallas_src>

<mosaic_0001>
module attributes {stable_mosaic.version = 11 : i64} {
  func.func @domain_classifier_kernel(%arg0: i32, %arg1: memref<16x640xbf16, #tpu.memory_space<vmem>>, %arg2: memref<640x256xbf16, #tpu.memory_space<vmem>>, %arg3: memref<1x256xf32, #tpu.memory_space<vmem>>, %arg4: memref<256x128xbf16, #tpu.memory_space<vmem>>, %arg5: memref<1x128xf32, #tpu.memory_space<vmem>>, %arg6: memref<128x64xbf16, #tpu.memory_space<vmem>>, %arg7: memref<1x64xf32, #tpu.memory_space<vmem>>, %arg8: memref<1x64xbf16, #tpu.memory_space<vmem>>, %arg9: memref<1x1xf32, #tpu.memory_space<vmem>>, %arg10: memref<16x1xf32, #tpu.memory_space<vmem>>) attributes {dimension_semantics = [#tpu.dimension_semantics<parallel>], iteration_bounds = array<i64: 1>, scalar_prefetch = 0 : i64, scratch_operands = 0 : i64, tpu.core_type = #tpu.core_type<tc>, window_params = [{transform_indices = @transform_0, window_bounds = array<i64: 16, 640>}, {pipeline_mode = #tpu.pipeline_mode<synchronous>, transform_indices = @transform_1, window_bounds = array<i64: 640, 256>}, {pipeline_mode = #tpu.pipeline_mode<synchronous>, transform_indices = @transform_2, window_bounds = array<i64: 1, 256>}, {pipeline_mode = #tpu.pipeline_mode<synchronous>, transform_indices = @transform_3, window_bounds = array<i64: 256, 128>}, {pipeline_mode = #tpu.pipeline_mode<synchronous>, transform_indices = @transform_4, window_bounds = array<i64: 1, 128>}, {pipeline_mode = #tpu.pipeline_mode<synchronous>, transform_indices = @transform_5, window_bounds = array<i64: 128, 64>}, {pipeline_mode = #tpu.pipeline_mode<synchronous>, transform_indices = @transform_6, window_bounds = array<i64: 1, 64>}, {pipeline_mode = #tpu.pipeline_mode<synchronous>, transform_indices = @transform_7, window_bounds = array<i64: 1, 64>}, {pipeline_mode = #tpu.pipeline_mode<synchronous>, transform_indices = @transform_8, window_bounds = array<i64: 1, 1>}, {transform_indices = @transform_9, window_bounds = array<i64: 16, 1>}]} {
    %c0 = arith.constant 0 : index
    %c0_0 = arith.constant 0 : index
    %0 = vector.load %arg1[%c0, %c0_0] : memref<16x640xbf16, #tpu.memory_space<vmem>>, vector<16x640xbf16>
    %c0_1 = arith.constant 0 : index
    %c0_2 = arith.constant 0 : index
    %1 = vector.load %arg2[%c0_1, %c0_2] : memref<640x256xbf16, #tpu.memory_space<vmem>>, vector<640x256xbf16>
    %cst = arith.constant dense<0.000000e+00> : vector<16x256xf32>
    %2 = tpu.matmul %0, %1, %cst {dimension_numbers = #tpu.dot_dimension_numbers<[1], [0], [0], [1], [0, 0, 1, 1], [], []>} : vector<16x640xbf16>, vector<640x256xbf16>, vector<16x256xf32> -> vector<16x256xf32>
    %c0_3 = arith.constant 0 : index
    %c0_4 = arith.constant 0 : index
    %3 = vector.load %arg3[%c0_3, %c0_4] : memref<1x256xf32, #tpu.memory_space<vmem>>, vector<1x256xf32>
    %4 = vector.broadcast %3 : vector<1x256xf32> to vector<16x256xf32>
    %5 = arith.addf %2, %4 : vector<16x256xf32>
    %cst_5 = arith.constant 0.000000e+00 : f32
    %6 = vector.broadcast %cst_5 : f32 to vector<16x256xf32>
    %7 = arith.maximumf %5, %6 : vector<16x256xf32>
    %8 = arith.truncf %7 : vector<16x256xf32> to vector<16x256xbf16>
    %c0_6 = arith.constant 0 : index
    %c0_7 = arith.constant 0 : index
    %9 = vector.load %arg4[%c0_6, %c0_7] : memref<256x128xbf16, #tpu.memory_space<vmem>>, vector<256x128xbf16>
    %cst_8 = arith.constant dense<0.000000e+00> : vector<16x128xf32>
    %10 = tpu.matmul %8, %9, %cst_8 {dimension_numbers = #tpu.dot_dimension_numbers<[1], [0], [0], [1], [0, 0, 1, 1], [], []>} : vector<16x256xbf16>, vector<256x128xbf16>, vector<16x128xf32> -> vector<16x128xf32>
    %c0_9 = arith.constant 0 : index
    %c0_10 = arith.constant 0 : index
    %11 = vector.load %arg5[%c0_9, %c0_10] : memref<1x128xf32, #tpu.memory_space<vmem>>, vector<1x128xf32>
    %12 = vector.broadcast %11 : vector<1x128xf32> to vector<16x128xf32>
    %13 = arith.addf %10, %12 : vector<16x128xf32>
    %cst_11 = arith.constant 0.000000e+00 : f32
    %14 = vector.broadcast %cst_11 : f32 to vector<16x128xf32>
    %15 = arith.maximumf %13, %14 : vector<16x128xf32>
    %16 = arith.truncf %15 : vector<16x128xf32> to vector<16x128xbf16>
    %c0_12 = arith.constant 0 : index
    %c0_13 = arith.constant 0 : index
    %17 = vector.load %arg6[%c0_12, %c0_13] : memref<128x64xbf16, #tpu.memory_space<vmem>>, vector<128x64xbf16>
    %cst_14 = arith.constant dense<0.000000e+00> : vector<16x64xf32>
    %18 = tpu.matmul %16, %17, %cst_14 {dimension_numbers = #tpu.dot_dimension_numbers<[1], [0], [0], [1], [0, 0, 1, 1], [], []>} : vector<16x128xbf16>, vector<128x64xbf16>, vector<16x64xf32> -> vector<16x64xf32>
    %c0_15 = arith.constant 0 : index
    %c0_16 = arith.constant 0 : index
    %19 = vector.load %arg7[%c0_15, %c0_16] : memref<1x64xf32, #tpu.memory_space<vmem>>, vector<1x64xf32>
    %20 = vector.broadcast %19 : vector<1x64xf32> to vector<16x64xf32>
    %21 = arith.addf %18, %20 : vector<16x64xf32>
    %cst_17 = arith.constant 0.000000e+00 : f32
    %22 = vector.broadcast %cst_17 : f32 to vector<16x64xf32>
    %23 = arith.maximumf %21, %22 : vector<16x64xf32>
    %c0_18 = arith.constant 0 : index
    %c0_19 = arith.constant 0 : index
    %24 = vector.load %arg8[%c0_18, %c0_19] : memref<1x64xbf16, #tpu.memory_space<vmem>>, vector<1x64xbf16>
    %25 = arith.extf %24 : vector<1x64xbf16> to vector<1x64xf32>
    %26 = vector.broadcast %25 : vector<1x64xf32> to vector<16x64xf32>
    %27 = arith.mulf %23, %26 : vector<16x64xf32>
    %cst_20 = arith.constant dense<0.000000e+00> : vector<16xf32>
    %28 = vector.multi_reduction <add>, %27, %cst_20 [1] : vector<16x64xf32> to vector<16xf32>
    %29 = vector.shape_cast %28 : vector<16xf32> to vector<16x1xf32>
    %c0_21 = arith.constant 0 : index
    %c0_22 = arith.constant 0 : index
    %30 = vector.load %arg9[%c0_21, %c0_22] : memref<1x1xf32, #tpu.memory_space<vmem>>, vector<1x1xf32>
    %31 = vector.broadcast %30 : vector<1x1xf32> to vector<16x1xf32>
    %32 = arith.addf %29, %31 : vector<16x1xf32>
    %c0_23 = arith.constant 0 : index
    %c0_24 = arith.constant 0 : index
    %33 = vector.load %arg10[%c0_23, %c0_24] : memref<16x1xf32, #tpu.memory_space<vmem>>, vector<16x1xf32>
    tpu.vector_store %arg10[%c0_23, %c0_24], %32 {strides = array<i32>} : memref<16x1xf32, #tpu.memory_space<vmem>>, vector<16x1xf32>,
    return
  }
  func.func @transform_0(%arg0: i32) -> (i32, i32) {
    %c0_i32 = arith.constant 0 : i32
    %c0_i32_0 = arith.constant 0 : i32
    return %arg0, %c0_i32 : i32, i32
  }
  func.func @transform_1(%arg0: i32) -> (i32, i32) {
    %c0_i32 = arith.constant 0 : i32
    %c0_i32_0 = arith.constant 0 : i32
    %c0_i32_1 = arith.constant 0 : i32
    return %c0_i32, %c0_i32_0 : i32, i32
  }
  func.func @transform_2(%arg0: i32) -> (i32, i32) {
    %c0_i32 = arith.constant 0 : i32
    %c0_i32_0 = arith.constant 0 : i32
    %c0_i32_1 = arith.constant 0 : i32
    return %c0_i32, %c0_i32_0 : i32, i32
  }
  func.func @transform_3(%arg0: i32) -> (i32, i32) {
    %c0_i32 = arith.constant 0 : i32
    %c0_i32_0 = arith.constant 0 : i32
    %c0_i32_1 = arith.constant 0 : i32
    return %c0_i32, %c0_i32_0 : i32, i32
  }
  func.func @transform_4(%arg0: i32) -> (i32, i32) {
    %c0_i32 = arith.constant 0 : i32
    %c0_i32_0 = arith.constant 0 : i32
    %c0_i32_1 = arith.constant 0 : i32
    return %c0_i32, %c0_i32_0 : i32, i32
  }
  func.func @transform_5(%arg0: i32) -> (i32, i32) {
    %c0_i32 = arith.constant 0 : i32
    %c0_i32_0 = arith.constant 0 : i32
    %c0_i32_1 = arith.constant 0 : i32
    return %c0_i32, %c0_i32_0 : i32, i32
  }
  func.func @transform_6(%arg0: i32) -> (i32, i32) {
    %c0_i32 = arith.constant 0 : i32
    %c0_i32_0 = arith.constant 0 : i32
    %c0_i32_1 = arith.constant 0 : i32
    return %c0_i32, %c0_i32_0 : i32, i32
  }
  func.func @transform_7(%arg0: i32) -> (i32, i32) {
    %c0_i32 = arith.constant 0 : i32
    %c0_i32_0 = arith.constant 0 : i32
    %c0_i32_1 = arith.constant 0 : i32
    return %c0_i32, %c0_i32_0 : i32, i32
  }
  func.func @transform_8(%arg0: i32) -> (i32, i32) {
    %c0_i32 = arith.constant 0 : i32
    %c0_i32_0 = arith.constant 0 : i32
    %c0_i32_1 = arith.constant 0 : i32
    return %c0_i32, %c0_i32_0 : i32, i32
  }
  func.func @transform_9(%arg0: i32) -> (i32, i32) {
    %c0_i32 = arith.constant 0 : i32
    %c0_i32_0 = arith.constant 0 : i32
    return %arg0, %c0_i32 : i32, i32
  }
}

</mosaic_0001>

<llo_original>
// kernel: tpu_custom_call.1
$region0: #{tpu_custom_call.1}
  #allocation0 [shape = 'u32[]', space=smem, size = 0x4, offset = 0x4, fixed_abs, tag = 'smem constant byte address 0x4 - core index']
  #allocation1 [shape = 'u32[144,128]{1,0:T(1,128)}', space=vmem, size = 0x12000, scoped, tag = 'internal scratch']
  #allocation2 [shape = 'f32[1,1]{1,0:T(1,128)S(1)}', space=vmem, size = 0x200, scoped, tag = 'scoped memory for tpu_custom_call.1']
  %s0 = inlined_call_operand.vmem [shape: bf16[16,640], index: 0, kind: input, shape index: {}]
  %s1 = inlined_call_operand.hbm [shape: bf16[640,256], index: 1, kind: input, shape index: {}]
  %s2 = inlined_call_operand.vmem [shape: f32[1,256], index: 2, kind: input, shape index: {}]
  %s3 = inlined_call_operand.hbm [shape: bf16[256,128], index: 3, kind: input, shape index: {}]
  %s4 = inlined_call_operand.vmem [shape: f32[1,128], index: 4, kind: input, shape index: {}]
  %s5 = inlined_call_operand.vmem [shape: bf16[128,64], index: 5, kind: input, shape index: {}]
  %s6 = inlined_call_operand.vmem [shape: f32[1,64], index: 6, kind: input, shape index: {}]
  %s7 = inlined_call_operand.vmem [shape: bf16[1,64], index: 7, kind: input, shape index: {}]
  %s8 = inlined_call_operand.<no memory space> [shape: f32[1,1], index: 8, kind: input, shape index: {}]
  %s9 = inlined_call_operand.vmem [shape: f32[16,1], index: 9, kind: output, shape index: {}]
  %s10 = sld [smem:[#allocation0]]
  $region54: #{tpu_custom_call.1} parent=0
    _
  %s12 = ssub.s32 1, %s10
  %s13 = scalar_select 0, %s12, %s10
  %v14 = vstv %s8
  %15 = vst [vmem:[#allocation2] sm:$0x1] %v14
  $region1: #{tpu_custom_call.1} parent=0
    #allocation3 [shape = 'u8[327680]{0}', space=vmem, size = 0x50000, scoped, tag = 'input window, operand 1, single buffered']
    #allocation4 [shape = 's32[1]{0}', space=sflag, size = 0x4, scoped, tag = 'scoped memory for tpu_custom_call.1']
    #allocation5 [shape = 'u8[65536]{0}', space=vmem, size = 0x10000, scoped, tag = 'input window, operand 3, single buffered']
    #allocation6 [shape = 's32[1]{0}', space=sflag, size = 0x4, scoped, tag = 'scoped memory for tpu_custom_call.1']
    %16 = vsyncpa [#allocation4], 0
    %17 = vsyncpa [#allocation6], 0
    // Predicated region
    $region2: #{tpu_custom_call.1} parent=1 // pred_check
      _
    $region3: #{tpu_custom_call.1} parent=1 // pred_check_branch
      %19 = sbr.rel (0) target = $region5
    $region4: #{tpu_custom_call.1} parent=1 // pred_region
      _
    $region5: #{tpu_custom_call.1} parent=1 // pred_fallthru
      _
    // Predicated region
    $region6: #{tpu_custom_call.1} parent=1 // pred_check
      _
    $region7: #{tpu_custom_call.1} parent=1 // pred_check_branch
      %21 = sbr.rel (0) target = $region9
    $region8: #{tpu_custom_call.1} parent=1 // pred_region
      %s23 = ssub.s32 10240, 10240
      %24 = vsyncadd [#allocation4], %s23
      %s25 = sshll.u32 [#allocation3], 4
      %s26 = int_to_ptr.vmem [resolvable:$true] %s25
      %31 = dma.hbm_to_vmem [thread:$0]  %s1, 10240, %s26, [#allocation4], 128, 128, 8
    $region9: #{tpu_custom_call.1} parent=1 // pred_fallthru
      _
    // Predicated region
    $region10: #{tpu_custom_call.1} parent=1 // pred_check
      _
    $region11: #{tpu_custom_call.1} parent=1 // pred_check_branch
      %33 = sbr.rel (0) target = $region13
    $region12: #{tpu_custom_call.1} parent=1 // pred_region
      _
    $region13: #{tpu_custom_call.1} parent=1 // pred_fallthru
      _
    // Predicated region
    $region14: #{tpu_custom_call.1} parent=1 // pred_check
      _
    $region15: #{tpu_custom_call.1} parent=1 // pred_check_branch
      %35 = sbr.rel (0) target = $region17
    $region16: #{tpu_custom_call.1} parent=1 // pred_region
      %s37 = ssub.s32 2048, 2048
      %38 = vsyncadd [#allocation6], %s37
      %s39 = sshll.u32 [#allocation5], 4
      %s40 = int_to_ptr.vmem [resolvable:$true] %s39
      %45 = dma.hbm_to_vmem [thread:$0]  %s3, 2048, %s40, [#allocation6], 64, 64, 4
    $region17: #{tpu_custom_call.1} parent=1 // pred_fallthru
      _
    // Predicated region
    $region18: #{tpu_custom_call.1} parent=1 // pred_check
      _
    $region19: #{tpu_custom_call.1} parent=1 // pred_check_branch
      %47 = sbr.rel (0) target = $region21
    $region20: #{tpu_custom_call.1} parent=1 // pred_region
      _
    $region21: #{tpu_custom_call.1} parent=1 // pred_fallthru
      _
    // Predicated region
    $region22: #{tpu_custom_call.1} parent=1 // pred_check
      _
    $region23: #{tpu_custom_call.1} parent=1 // pred_check_branch
      %49 = sbr.rel (0) target = $region25
    $region24: #{tpu_custom_call.1} parent=1 // pred_region
      _
    $region25: #{tpu_custom_call.1} parent=1 // pred_fallthru
      _
    // Predicated region
    $region26: #{tpu_custom_call.1} parent=1 // pred_check
      _
    $region27: #{tpu_custom_call.1} parent=1 // pred_check_branch
      %51 = sbr.rel (0) target = $region29
    $region28: #{tpu_custom_call.1} parent=1 // pred_region
      _
    $region29: #{tpu_custom_call.1} parent=1 // pred_fallthru
      _
    // Predicated region
    $region30: #{tpu_custom_call.1} parent=1 // pred_check
      _
    $region31: #{tpu_custom_call.1} parent=1 // pred_check_branch
      %53 = sbr.rel (0) target = $region33
    $region32: #{tpu_custom_call.1} parent=1 // pred_region
      _
    $region33: #{tpu_custom_call.1} parent=1 // pred_fallthru
      _
    // Predicated region
    $region34: #{tpu_custom_call.1} parent=1 // pred_check
      _
    $region35: #{tpu_custom_call.1} parent=1 // pred_check_branch
      %55 = sbr.rel (0) target = $region37
    $region36: #{tpu_custom_call.1} parent=1 // pred_region
      _
    $region37: #{tpu_custom_call.1} parent=1 // pred_fallthru
      _
    // Predicated region
    $region38: #{tpu_custom_call.1} parent=1 // pred_check
      _
    $region39: #{tpu_custom_call.1} parent=1 // pred_check_branch
      %57 = sbr.rel (0) target = $region41
    $region40: #{tpu_custom_call.1} parent=1 // pred_region
      %58 = dma.done [#allocation4], 10240
    $region41: #{tpu_custom_call.1} parent=1 // pred_fallthru
      _
    // Predicated region
    $region42: #{tpu_custom_call.1} parent=1 // pred_check
      _
    $region43: #{tpu_custom_call.1} parent=1 // pred_check_branch
      %60 = sbr.rel (0) target = $region45
    $region44: #{tpu_custom_call.1} parent=1 // pred_region
      %61 = dma.done [#allocation6], 2048
    $region45: #{tpu_custom_call.1} parent=1 // pred_fallthru
      _
    %v63 = vld [vmem:[%s0] sm:$0xff]
    %v64 = vld [vmem:[%s0 + $0x8] sm:$0xff]
    %v65 = vld [vmem:[%s0 + $0x10] sm:$0xf]
    %v66 = vld [vmem:[%s0 + $0x14] sm:$0xff]
    %v67 = vld [vmem:[%s0 + $0x1c] sm:$0xff]
    %v68 = vld [vmem:[%s0 + $0x24] sm:$0xf]
    %v69 = vld [vmem:[#allocation3] sm:$0xff]
    %v70 = vld [vmem:[#allocation3 + $0x8] sm:$0xff]
    %v71 = vld [vmem:[#allocation3 + $0x10] sm:$0xff]
    %v72 = vld [vmem:[#allocation3 + $0x18] sm:$0xff]
    %v73 = vld [vmem:[#allocation3 + $0x20] sm:$0xff]
    %v74 = vld [vmem:[#allocation3 + $0x28] sm:$0xff]
    %v75 = vld [vmem:[#allocation3 + $0x30] sm:$0xff]
    %v76 = vld [vmem:[#allocation3 + $0x38] sm:$0xff]
    %v77 = vld [vmem:[#allocation3 + $0x40] sm:$0xff]
    %v78 = vld [vmem:[#allocation3 + $0x48] sm:$0xff]
    %v79 = vld [vmem:[#allocation3 + $0x50] sm:$0xff]
    %v80 = vld [vmem:[#allocation3 + $0x58] sm:$0xff]
    %v81 = vld [vmem:[#allocation3 + $0x60] sm:$0xff]
    %v82 = vld [vmem:[#allocation3 + $0x68] sm:$0xff]
    %v83 = vld [vmem:[#allocation3 + $0x70] sm:$0xff]
    %v84 = vld [vmem:[#allocation3 + $0x78] sm:$0xff]
    %v85 = vld [vmem:[#allocation3 + $0x80] sm:$0xff]
    %v86 = vld [vmem:[#allocation3 + $0x88] sm:$0xff]
    %v87 = vld [vmem:[#allocation3 + $0x90] sm:$0xff]
    %v88 = vld [vmem:[#allocation3 + $0x98] sm:$0xff]
    %v89 = vld [vmem:[#allocation3 + $0xa0] sm:$0xff]
    %v90 = vld [vmem:[#allocation3 + $0xa8] sm:$0xff]
    %v91 = vld [vmem:[#allocation3 + $0xb0] sm:$0xff]
    %v92 = vld [vmem:[#allocation3 + $0xb8] sm:$0xff]
    %v93 = vld [vmem:[#allocation3 + $0xc0] sm:$0xff]
    %v94 = vld [vmem:[#allocation3 + $0xc8] sm:$0xff]
    %v95 = vld [vmem:[#allocation3 + $0xd0] sm:$0xff]
    %v96 = vld [vmem:[#allocation3 + $0xd8] sm:$0xff]
    %v97 = vld [vmem:[#allocation3 + $0xe0] sm:$0xff]
    %v98 = vld [vmem:[#allocation3 + $0xe8] sm:$0xff]
    %v99 = vld [vmem:[#allocation3 + $0xf0] sm:$0xff]
    %v100 = vld [vmem:[#allocation3 + $0xf8] sm:$0xff]
    %v101 = vld [vmem:[#allocation3 + $0x100] sm:$0xff]
    %v102 = vld [vmem:[#allocation3 + $0x108] sm:$0xff]
    %v103 = vld [vmem:[#allocation3 + $0x110] sm:$0xff]
    %v104 = vld [vmem:[#allocation3 + $0x118] sm:$0xff]
    %v105 = vld [vmem:[#allocation3 + $0x120] sm:$0xff]
    %v106 = vld [vmem:[#allocation3 + $0x128] sm:$0xff]
    %v107 = vld [vmem:[#allocation3 + $0x130] sm:$0xff]
    %v108 = vld [vmem:[#allocation3 + $0x138] sm:$0xff]
    %v109 = vld [vmem:[#allocation3 + $0x140] sm:$0xff]
    %v110 = vld [vmem:[#allocation3 + $0x148] sm:$0xff]
    %v111 = vld [vmem:[#allocation3 + $0x150] sm:$0xff]
    %v112 = vld [vmem:[#allocation3 + $0x158] sm:$0xff]
    %v113 = vld [vmem:[#allocation3 + $0x160] sm:$0xff]
    %v114 = vld [vmem:[#allocation3 + $0x168] sm:$0xff]
    %v115 = vld [vmem:[#allocation3 + $0x170] sm:$0xff]
    %v116 = vld [vmem:[#allocation3 + $0x178] sm:$0xff]
    %v117 = vld [vmem:[#allocation3 + $0x180] sm:$0xff]
    %v118 = vld [vmem:[#allocation3 + $0x188] sm:$0xff]
    %v119 = vld [vmem:[#allocation3 + $0x190] sm:$0xff]
    %v120 = vld [vmem:[#allocation3 + $0x198] sm:$0xff]
    %v121 = vld [vmem:[#allocation3 + $0x1a0] sm:$0xff]
    %v122 = vld [vmem:[#allocation3 + $0x1a8] sm:$0xff]
    %v123 = vld [vmem:[#allocation3 + $0x1b0] sm:$0xff]
    %v124 = vld [vmem:[#allocation3 + $0x1b8] sm:$0xff]
    %v125 = vld [vmem:[#allocation3 + $0x1c0] sm:$0xff]
    %v126 = vld [vmem:[#allocation3 + $0x1c8] sm:$0xff]
    %v127 = vld [vmem:[#allocation3 + $0x1d0] sm:$0xff]
    %v128 = vld [vmem:[#allocation3 + $0x1d8] sm:$0xff]
    %v129 = vld [vmem:[#allocation3 + $0x1e0] sm:$0xff]
    %v130 = vld [vmem:[#allocation3 + $0x1e8] sm:$0xff]
    %v131 = vld [vmem:[#allocation3 + $0x1f0] sm:$0xff]
    %v132 = vld [vmem:[#allocation3 + $0x1f8] sm:$0xff]
    %v133 = vld [vmem:[#allocation3 + $0x200] sm:$0xff]
    %v134 = vld [vmem:[#allocation3 + $0x208] sm:$0xff]
    %v135 = vld [vmem:[#allocation3 + $0x210] sm:$0xff]
    %v136 = vld [vmem:[#allocation3 + $0x218] sm:$0xff]
    %v137 = vld [vmem:[#allocation3 + $0x220] sm:$0xff]
    %v138 = vld [vmem:[#allocation3 + $0x228] sm:$0xff]
    %v139 = vld [vmem:[#allocation3 + $0x230] sm:$0xff]
    %v140 = vld [vmem:[#allocation3 + $0x238] sm:$0xff]
    %v141 = vld [vmem:[#allocation3 + $0x240] sm:$0xff]
    %v142 = vld [vmem:[#allocation3 + $0x248] sm:$0xff]
    %v143 = vld [vmem:[#allocation3 + $0x250] sm:$0xff]
    %v144 = vld [vmem:[#allocation3 + $0x258] sm:$0xff]
    %v145 = vld [vmem:[#allocation3 + $0x260] sm:$0xff]
    %v146 = vld [vmem:[#allocation3 + $0x268] sm:$0xff]
    %v147 = vld [vmem:[#allocation3 + $0x270] sm:$0xff]
    %v148 = vld [vmem:[#allocation3 + $0x278] sm:$0xff]
    %v149 = vld [vmem:[%s2] sm:$0x3]
    %v151 = vlaneseq
    %v152 = vshrl.u32 %v151, 7
    %v153 = vsub.s32 0, %v152
    %v154 = vrot.slane %v149, %v153
    %v155 = vlaneseq
    %v156 = vshrl.u32 %v155, 7
    %v157 = vsub.s32 1, %v156
    %v158 = vrot.slane %v149, %v157
    %v167 = vunpack.c.l.b16 %v63
    %v168 = vunpack.c.h.b16 %v63
    %v169 = vunpack.c.l.b16 %v64
    %v170 = vunpack.c.h.b16 %v64
    %v171 = vunpack.c.l.b16 %v65
    %v172 = vunpack.c.l.b16 %v66
    %v173 = vunpack.c.h.b16 %v66
    %v174 = vunpack.c.l.b16 %v67
    %v175 = vunpack.c.h.b16 %v67
    %v176 = vunpack.c.l.b16 %v68
    %v177 = vpack.c.b16 %v172, %v167
    %v178 = vpack.c.b16 %v173, %v168
    %v179 = vpack.c.b16 %v174, %v169
    %v180 = vpack.c.b16 %v175, %v170
    %v181 = vpack.c.b16 %v176, %v171
    %v267 = vunpack.c.l.b16 %v69
    %v268 = vunpack.c.h.b16 %v69
    %v269 = vunpack.c.l.b16 %v70
    %v270 = vunpack.c.h.b16 %v70
    %v271 = vunpack.c.l.b16 %v71
    %v272 = vunpack.c.h.b16 %v71
    %v273 = vunpack.c.l.b16 %v72
    %v274 = vunpack.c.h.b16 %v72
    %v275 = vunpack.c.l.b16 %v73
    %v276 = vunpack.c.h.b16 %v73
    %v277 = vunpack.c.l.b16 %v74
    %v278 = vunpack.c.h.b16 %v74
    %v279 = vunpack.c.l.b16 %v75
    %v280 = vunpack.c.h.b16 %v75
    %v281 = vunpack.c.l.b16 %v76
    %v282 = vunpack.c.h.b16 %v76
    %v283 = vunpack.c.l.b16 %v77
    %v284 = vunpack.c.h.b16 %v77
    %v285 = vunpack.c.l.b16 %v78
    %v286 = vunpack.c.h.b16 %v78
    %v287 = vunpack.c.l.b16 %v79
    %v288 = vunpack.c.h.b16 %v79
    %v289 = vunpack.c.l.b16 %v80
    %v290 = vunpack.c.h.b16 %v80
    %v291 = vunpack.c.l.b16 %v81
    %v292 = vunpack.c.h.b16 %v81
    %v293 = vunpack.c.l.b16 %v82
    %v294 = vunpack.c.h.b16 %v82
    %v295 = vunpack.c.l.b16 %v83
    %v296 = vunpack.c.h.b16 %v83
    %v297 = vunpack.c.l.b16 %v84
    %v298 = vunpack.c.h.b16 %v84
    %v299 = vunpack.c.l.b16 %v85
    %v300 = vunpack.c.h.b16 %v85
    %v301 = vunpack.c.l.b16 %v86
    %v302 = vunpack.c.h.b16 %v86
    %v303 = vunpack.c.l.b16 %v87
    %v304 = vunpack.c.h.b16 %v87
    %v305 = vunpack.c.l.b16 %v88
    %v306 = vunpack.c.h.b16 %v88
    %v307 = vunpack.c.l.b16 %v89
    %v308 = vunpack.c.h.b16 %v89
    %v309 = vunpack.c.l.b16 %v90
    %v310 = vunpack.c.h.b16 %v90
    %v311 = vunpack.c.l.b16 %v91
    %v312 = vunpack.c.h.b16 %v91
    %v313 = vunpack.c.l.b16 %v92
    %v314 = vunpack.c.h.b16 %v92
    %v315 = vunpack.c.l.b16 %v93
    %v316 = vunpack.c.h.b16 %v93
    %v317 = vunpack.c.l.b16 %v94
    %v318 = vunpack.c.h.b16 %v94
    %v319 = vunpack.c.l.b16 %v95
    %v320 = vunpack.c.h.b16 %v95
    %v321 = vunpack.c.l.b16 %v96
    %v322 = vunpack.c.h.b16 %v96
    %v323 = vunpack.c.l.b16 %v97
    %v324 = vunpack.c.h.b16 %v97
    %v325 = vunpack.c.l.b16 %v98
    %v326 = vunpack.c.h.b16 %v98
    %v327 = vunpack.c.l.b16 %v99
    %v328 = vunpack.c.h.b16 %v99
    %v329 = vunpack.c.l.b16 %v100
    %v330 = vunpack.c.h.b16 %v100
    %v331 = vunpack.c.l.b16 %v101
    %v332 = vunpack.c.h.b16 %v101
    %v333 = vunpack.c.l.b16 %v102
    %v334 = vunpack.c.h.b16 %v102
    %v335 = vunpack.c.l.b16 %v103
    %v336 = vunpack.c.h.b16 %v103
    %v337 = vunpack.c.l.b16 %v104
    %v338 = vunpack.c.h.b16 %v104
    %v339 = vunpack.c.l.b16 %v105
    %v340 = vunpack.c.h.b16 %v105
    %v341 = vunpack.c.l.b16 %v106
    %v342 = vunpack.c.h.b16 %v106
    %v343 = vunpack.c.l.b16 %v107
    %v344 = vunpack.c.h.b16 %v107
    %v345 = vunpack.c.l.b16 %v108
    %v346 = vunpack.c.h.b16 %v108
    %v347 = vunpack.c.l.b16 %v109
    %v348 = vunpack.c.h.b16 %v109
    %v349 = vunpack.c.l.b16 %v110
    %v350 = vunpack.c.h.b16 %v110
    %v351 = vunpack.c.l.b16 %v111
    %v352 = vunpack.c.h.b16 %v111
    %v353 = vunpack.c.l.b16 %v112
    %v354 = vunpack.c.h.b16 %v112
    %v355 = vunpack.c.l.b16 %v113
    %v356 = vunpack.c.h.b16 %v113
    %v357 = vunpack.c.l.b16 %v114
    %v358 = vunpack.c.h.b16 %v114
    %v359 = vunpack.c.l.b16 %v115
    %v360 = vunpack.c.h.b16 %v115
    %v361 = vunpack.c.l.b16 %v116
    %v362 = vunpack.c.h.b16 %v116
    %v363 = vunpack.c.l.b16 %v117
    %v364 = vunpack.c.h.b16 %v117
    %v365 = vunpack.c.l.b16 %v118
    %v366 = vunpack.c.h.b16 %v118
    %v367 = vunpack.c.l.b16 %v119
    %v368 = vunpack.c.h.b16 %v119
    %v369 = vunpack.c.l.b16 %v120
    %v370 = vunpack.c.h.b16 %v120
    %v371 = vunpack.c.l.b16 %v121
    %v372 = vunpack.c.h.b16 %v121
    %v373 = vunpack.c.l.b16 %v122
    %v374 = vunpack.c.h.b16 %v122
    %v375 = vunpack.c.l.b16 %v123
    %v376 = vunpack.c.h.b16 %v123
    %v377 = vunpack.c.l.b16 %v124
    %v378 = vunpack.c.h.b16 %v124
    %v379 = vunpack.c.l.b16 %v125
    %v380 = vunpack.c.h.b16 %v125
    %v381 = vunpack.c.l.b16 %v126
    %v382 = vunpack.c.h.b16 %v126
    %v383 = vunpack.c.l.b16 %v127
    %v384 = vunpack.c.h.b16 %v127
    %v385 = vunpack.c.l.b16 %v128
    %v386 = vunpack.c.h.b16 %v128
    %v387 = vunpack.c.l.b16 %v129
    %v388 = vunpack.c.h.b16 %v129
    %v389 = vunpack.c.l.b16 %v130
    %v390 = vunpack.c.h.b16 %v130
    %v391 = vunpack.c.l.b16 %v131
    %v392 = vunpack.c.h.b16 %v131
    %v393 = vunpack.c.l.b16 %v132
    %v394 = vunpack.c.h.b16 %v132
    %v395 = vunpack.c.l.b16 %v133
    %v396 = vunpack.c.h.b16 %v133
    %v397 = vunpack.c.l.b16 %v134
    %v398 = vunpack.c.h.b16 %v134
    %v399 = vunpack.c.l.b16 %v135
    %v400 = vunpack.c.h.b16 %v135
    %v401 = vunpack.c.l.b16 %v136
    %v402 = vunpack.c.h.b16 %v136
    %v403 = vunpack.c.l.b16 %v137
    %v404 = vunpack.c.h.b16 %v137
    %v405 = vunpack.c.l.b16 %v138
    %v406 = vunpack.c.h.b16 %v138
    %v407 = vunpack.c.l.b16 %v139
    %v408 = vunpack.c.h.b16 %v139
    %v409 = vunpack.c.l.b16 %v140
    %v410 = vunpack.c.h.b16 %v140
    %v411 = vunpack.c.l.b16 %v141
    %v412 = vunpack.c.h.b16 %v141
    %v413 = vunpack.c.l.b16 %v142
    %v414 = vunpack.c.h.b16 %v142
    %v415 = vunpack.c.l.b16 %v143
    %v416 = vunpack.c.h.b16 %v143
    %v417 = vunpack.c.l.b16 %v144
    %v418 = vunpack.c.h.b16 %v144
    %v419 = vunpack.c.l.b16 %v145
    %v420 = vunpack.c.h.b16 %v145
    %v421 = vunpack.c.l.b16 %v146
    %v422 = vunpack.c.h.b16 %v146
    %v423 = vunpack.c.l.b16 %v147
    %v424 = vunpack.c.h.b16 %v147
    %v425 = vunpack.c.l.b16 %v148
    %v426 = vunpack.c.h.b16 %v148
    %v427 = vpack.c.b16 %v269, %v267
    %v428 = vpack.c.b16 %v270, %v268
    %v429 = vpack.c.b16 %v273, %v271
    %v430 = vpack.c.b16 %v274, %v272
    %v431 = vpack.c.b16 %v277, %v275
    %v432 = vpack.c.b16 %v278, %v276
    %v433 = vpack.c.b16 %v281, %v279
    %v434 = vpack.c.b16 %v282, %v280
    %v435 = vpack.c.b16 %v285, %v283
    %v436 = vpack.c.b16 %v286, %v284
    %v437 = vpack.c.b16 %v289, %v287
    %v438 = vpack.c.b16 %v290, %v288
    %v439 = vpack.c.b16 %v293, %v291
    %v440 = vpack.c.b16 %v294, %v292
    %v441 = vpack.c.b16 %v297, %v295
    %v442 = vpack.c.b16 %v298, %v296
    %v443 = vpack.c.b16 %v301, %v299
    %v444 = vpack.c.b16 %v302, %v300
    %v445 = vpack.c.b16 %v305, %v303
    %v446 = vpack.c.b16 %v306, %v304
    %v447 = vpack.c.b16 %v309, %v307
    %v448 = vpack.c.b16 %v310, %v308
    %v449 = vpack.c.b16 %v313, %v311
    %v450 = vpack.c.b16 %v314, %v312
    %v451 = vpack.c.b16 %v317, %v315
    %v452 = vpack.c.b16 %v318, %v316
    %v453 = vpack.c.b16 %v321, %v319
    %v454 = vpack.c.b16 %v322, %v320
    %v455 = vpack.c.b16 %v325, %v323
    %v456 = vpack.c.b16 %v326, %v324
    %v457 = vpack.c.b16 %v329, %v327
    %v458 = vpack.c.b16 %v330, %v328
    %v459 = vpack.c.b16 %v333, %v331
    %v460 = vpack.c.b16 %v334, %v332
    %v461 = vpack.c.b16 %v337, %v335
    %v462 = vpack.c.b16 %v338, %v336
    %v463 = vpack.c.b16 %v341, %v339
    %v464 = vpack.c.b16 %v342, %v340
    %v465 = vpack.c.b16 %v345, %v343
    %v466 = vpack.c.b16 %v346, %v344
    %v467 = vpack.c.b16 %v349, %v347
    %v468 = vpack.c.b16 %v350, %v348
    %v469 = vpack.c.b16 %v353, %v351
    %v470 = vpack.c.b16 %v354, %v352
    %v471 = vpack.c.b16 %v357, %v355
    %v472 = vpack.c.b16 %v358, %v356
    %v473 = vpack.c.b16 %v361, %v359
    %v474 = vpack.c.b16 %v362, %v360
    %v475 = vpack.c.b16 %v365, %v363
    %v476 = vpack.c.b16 %v366, %v364
    %v477 = vpack.c.b16 %v369, %v367
    %v478 = vpack.c.b16 %v370, %v368
    %v479 = vpack.c.b16 %v373, %v371
    %v480 = vpack.c.b16 %v374, %v372
    %v481 = vpack.c.b16 %v377, %v375
    %v482 = vpack.c.b16 %v378, %v376
    %v483 = vpack.c.b16 %v381, %v379
    %v484 = vpack.c.b16 %v382, %v380
    %v485 = vpack.c.b16 %v385, %v383
    %v486 = vpack.c.b16 %v386, %v384
    %v487 = vpack.c.b16 %v389, %v387
    %v488 = vpack.c.b16 %v390, %v388
    %v489 = vpack.c.b16 %v393, %v391
    %v490 = vpack.c.b16 %v394, %v392
    %v491 = vpack.c.b16 %v397, %v395
    %v492 = vpack.c.b16 %v398, %v396
    %v493 = vpack.c.b16 %v401, %v399
    %v494 = vpack.c.b16 %v402, %v400
    %v495 = vpack.c.b16 %v405, %v403
    %v496 = vpack.c.b16 %v406, %v404
    %v497 = vpack.c.b16 %v409, %v407
    %v498 = vpack.c.b16 %v410, %v408
    %v499 = vpack.c.b16 %v413, %v411
    %v500 = vpack.c.b16 %v414, %v412
    %v501 = vpack.c.b16 %v417, %v415
    %v502 = vpack.c.b16 %v418, %v416
    %v503 = vpack.c.b16 %v421, %v419
    %v504 = vpack.c.b16 %v422, %v420
    %v505 = vpack.c.b16 %v425, %v423
    %v506 = vpack.c.b16 %v426, %v424
    %587 = vmatprep.subr.bf16.mxu0 %v442
    %588 = vmatpush1.bf16.msra.mxu0 %v441
    %589 = vmatprep.subr.bf16.mxu0 %v440
    %590 = vmatpush1.bf16.msra.mxu0 %v439
    %591 = vmatprep.subr.bf16.mxu0 %v438
    %592 = vmatpush1.bf16.msra.mxu0 %v437
    %593 = vmatprep.subr.bf16.mxu0 %v436
    %594 = vmatpush1.bf16.msra.mxu0 %v435
    %595 = vmatprep.subr.bf16.mxu0 %v434
    %596 = vmatpush1.bf16.msra.mxu0 %v433
    %597 = vmatprep.subr.bf16.mxu0 %v432
    %598 = vmatpush1.bf16.msra.mxu0 %v431
    %599 = vmatprep.subr.bf16.mxu0 %v430
    %600 = vmatpush1.bf16.msra.mxu0 %v429
    %601 = vmatprep.subr.bf16.mxu0 %v428
    %602 = vmatpush1.bf16.msra.mxu0 %v427
    %603 = vmatprep.subr.bf16.mxu0 %v458
    %604 = vmatpush2.bf16.msra.mxu0 %v457
    %605 = vmatprep.subr.bf16.mxu0 %v456
    %606 = vmatpush2.bf16.msra.mxu0 %v455
    %607 = vmatprep.subr.bf16.mxu0 %v454
    %608 = vmatpush2.bf16.msra.mxu0 %v453
    %609 = vmatprep.subr.bf16.mxu0 %v452
    %610 = vmatpush2.bf16.msra.mxu0 %v451
    %611 = vmatprep.subr.bf16.mxu0 %v450
    %612 = vmatpush2.bf16.msra.mxu0 %v449
    %613 = vmatprep.subr.bf16.mxu0 %v448
    %614 = vmatpush2.bf16.msra.mxu0 %v447
    %615 = vmatprep.subr.bf16.mxu0 %v446
    %616 = vmatpush2.bf16.msra.mxu0 %v445
    %617 = vmatprep.subr.bf16.mxu0 %v444
    %618 = vmatpush2.bf16.msra.mxu0 %v443
    %619 = vmatprep.mubr.bf16.mxu0 %v178
    %620 = vmatmul.mubr.bf16.gmra.mxu0 %v177
    %v621 = vpop.f32.mrf.mxu0
    %v622 = vadd.f32 %v154, %v621
    %v623 = vpop.f32.mrf.mxu0
    %v624 = vadd.f32 %v158, %v623
    %v625 = vpop.f32.mrf.mxu0
    %v626 = vadd.f32 %v154, %v625
    %v627 = vpop.f32.mrf.mxu0
    %v628 = vadd.f32 %v158, %v627
    %629 = vdwg.mxu0
    %630 = vmatprep.subr.bf16.mxu0 %v474
    %631 = vmatpush1.bf16.msra.mxu0 %v473
    %632 = vmatprep.subr.bf16.mxu0 %v472
    %633 = vmatpush1.bf16.msra.mxu0 %v471
    %634 = vmatprep.subr.bf16.mxu0 %v470
    %635 = vmatpush1.bf16.msra.mxu0 %v469
    %636 = vmatprep.subr.bf16.mxu0 %v468
    %637 = vmatpush1.bf16.msra.mxu0 %v467
    %638 = vmatprep.subr.bf16.mxu0 %v466
    %639 = vmatpush1.bf16.msra.mxu0 %v465
    %640 = vmatprep.subr.bf16.mxu0 %v464
    %641 = vmatpush1.bf16.msra.mxu0 %v463
    %642 = vmatprep.subr.bf16.mxu0 %v462
    %643 = vmatpush1.bf16.msra.mxu0 %v461
    %644 = vmatprep.subr.bf16.mxu0 %v460
    %645 = vmatpush1.bf16.msra.mxu0 %v459
    %646 = vmatprep.subr.bf16.mxu0 %v490
    %647 = vmatpush2.bf16.msra.mxu0 %v489
    %648 = vmatprep.subr.bf16.mxu0 %v488
    %649 = vmatpush2.bf16.msra.mxu0 %v487
    %650 = vmatprep.subr.bf16.mxu0 %v486
    %651 = vmatpush2.bf16.msra.mxu0 %v485
    %652 = vmatprep.subr.bf16.mxu0 %v484
    %653 = vmatpush2.bf16.msra.mxu0 %v483
    %654 = vmatprep.subr.bf16.mxu0 %v482
    %655 = vmatpush2.bf16.msra.mxu0 %v481
    %656 = vmatprep.subr.bf16.mxu0 %v480
    %657 = vmatpush2.bf16.msra.mxu0 %v479
    %658 = vmatprep.subr.bf16.mxu0 %v478
    %659 = vmatpush2.bf16.msra.mxu0 %v477
    %660 = vmatprep.subr.bf16.mxu0 %v476
    %661 = vmatpush2.bf16.msra.mxu0 %v475
    %662 = vmatprep.mubr.bf16.mxu0 %v180
    %663 = vmatmul.mubr.bf16.gmra.mxu0 %v179
    %v664 = vpop.f32.mrf.mxu0
    %v665 = vadd.f32 %v622, %v664
    %v666 = vpop.f32.mrf.mxu0
    %v667 = vadd.f32 %v624, %v666
    %v668 = vpop.f32.mrf.mxu0
    %v669 = vadd.f32 %v626, %v668
    %v670 = vpop.f32.mrf.mxu0
    %v671 = vadd.f32 %v628, %v670
    %672 = vdwg.mxu0
    %673 = vmatprep.subr.bf16.mxu0 %v506
    %674 = vmatpush1.bf16.msra.mxu0 %v505
    %675 = vmatprep.subr.bf16.mxu0 %v504
    %676 = vmatpush1.bf16.msra.mxu0 %v503
    %677 = vmatprep.subr.bf16.mxu0 %v502
    %678 = vmatpush1.bf16.msra.mxu0 %v501
    %679 = vmatprep.subr.bf16.mxu0 %v500
    %680 = vmatpush1.bf16.msra.mxu0 %v499
    %681 = vmatprep.subr.bf16.mxu0 %v498
    %682 = vmatpush1.bf16.msra.mxu0 %v497
    %683 = vmatprep.subr.bf16.mxu0 %v496
    %684 = vmatpush1.bf16.msra.mxu0 %v495
    %685 = vmatprep.subr.bf16.mxu0 %v494
    %686 = vmatpush1.bf16.msra.mxu0 %v493
    %687 = vmatprep.subr.bf16.mxu0 %v492
    %688 = vmatpush1.bf16.msra.mxu0 %v491
    %689 = vmatprep.subr.bf16.mxu0 0
    %690 = vmatpush2.bf16.msra.mxu0 0
    %691 = vmatprep.subr.bf16.mxu0 0
    %692 = vmatpush2.bf16.msra.mxu0 0
    %693 = vmatprep.subr.bf16.mxu0 0
    %694 = vmatpush2.bf16.msra.mxu0 0
    %695 = vmatprep.subr.bf16.mxu0 0
    %696 = vmatpush2.bf16.msra.mxu0 0
    %697 = vmatprep.subr.bf16.mxu0 0
    %698 = vmatpush2.bf16.msra.mxu0 0
    %699 = vmatprep.subr.bf16.mxu0 0
    %700 = vmatpush2.bf16.msra.mxu0 0
    %701 = vmatprep.subr.bf16.mxu0 0
    %702 = vmatpush2.bf16.msra.mxu0 0
    %703 = vmatprep.subr.bf16.mxu0 0
    %704 = vmatpush2.bf16.msra.mxu0 0
    %705 = vmatprep.mubr.bf16.mxu0 0
    %706 = vmatmul.mubr.bf16.gmra.mxu0 %v181
    %v707 = vpop.f32.mrf.mxu0
    %v708 = vadd.f32 %v665, %v707
    %v709 = vpop.f32.mrf.mxu0
    %v710 = vadd.f32 %v667, %v709
    %v711 = vpop.f32.mrf.mxu0
    %v712 = vadd.f32 %v669, %v711
    %v713 = vpop.f32.mrf.mxu0
    %v714 = vadd.f32 %v671, %v713
    %715 = vdwg.mxu0
    %v716 = vmax.f32 %v708, 0.0
    %v717 = vmax.f32 %v710, 0.0
    %v718 = vmax.f32 %v712, 0.0
    %v719 = vmax.f32 %v714, 0.0
    %v720 = vpack.c.bf16 %v718, %v716
    %v721 = vpack.c.bf16 %v719, %v717
    %v722 = vld [vmem:[#allocation5] sm:$0xf]
    %v723 = vld [vmem:[#allocation5 + $0x4] sm:$0xf]
    %v724 = vld [vmem:[#allocation5 + $0x8] sm:$0xf]
    %v725 = vld [vmem:[#allocation5 + $0xc] sm:$0xf]
    %v726 = vld [vmem:[#allocation5 + $0x10] sm:$0xf]
    %v727 = vld [vmem:[#allocation5 + $0x14] sm:$0xf]
    %v728 = vld [vmem:[#allocation5 + $0x18] sm:$0xf]
    %v729 = vld [vmem:[#allocation5 + $0x1c] sm:$0xf]
    %v730 = vld [vmem:[#allocation5 + $0x20] sm:$0xf]
    %v731 = vld [vmem:[#allocation5 + $0x24] sm:$0xf]
    %v732 = vld [vmem:[#allocation5 + $0x28] sm:$0xf]
    %v733 = vld [vmem:[#allocation5 + $0x2c] sm:$0xf]
    %v734 = vld [vmem:[#allocation5 + $0x30] sm:$0xf]
    %v735 = vld [vmem:[#allocation5 + $0x34] sm:$0xf]
    %v736 = vld [vmem:[#allocation5 + $0x38] sm:$0xf]
    %v737 = vld [vmem:[#allocation5 + $0x3c] sm:$0xf]
    %v738 = vld [vmem:[#allocation5 + $0x40] sm:$0xf]
    %v739 = vld [vmem:[#allocation5 + $0x44] sm:$0xf]
    %v740 = vld [vmem:[#allocation5 + $0x48] sm:$0xf]
    %v741 = vld [vmem:[#allocation5 + $0x4c] sm:$0xf]
    %v742 = vld [vmem:[#allocation5 + $0x50] sm:$0xf]
    %v743 = vld [vmem:[#allocation5 + $0x54] sm:$0xf]
    %v744 = vld [vmem:[#allocation5 + $0x58] sm:$0xf]
    %v745 = vld [vmem:[#allocation5 + $0x5c] sm:$0xf]
    %v746 = vld [vmem:[#allocation5 + $0x60] sm:$0xf]
    %v747 = vld [vmem:[#allocation5 + $0x64] sm:$0xf]
    %v748 = vld [vmem:[#allocation5 + $0x68] sm:$0xf]
    %v749 = vld [vmem:[#allocation5 + $0x6c] sm:$0xf]
    %v750 = vld [vmem:[#allocation5 + $0x70] sm:$0xf]
    %v751 = vld [vmem:[#allocation5 + $0x74] sm:$0xf]
    %v752 = vld [vmem:[#allocation5 + $0x78] sm:$0xf]
    %v753 = vld [vmem:[#allocation5 + $0x7c] sm:$0xf]
    %v754 = vld [vmem:[%s4] sm:$0x1]
    %v756 = vlaneseq
    %v757 = vshrl.u32 %v756, 7
    %v758 = vsub.s32 0, %v757
    %v759 = vrot.slane %v754, %v758
    %v793 = vunpack.c.l.b16 %v722
    %v794 = vunpack.c.l.b16 %v723
    %v795 = vunpack.c.l.b16 %v724
    %v796 = vunpack.c.l.b16 %v725
    %v797 = vunpack.c.l.b16 %v726
    %v798 = vunpack.c.l.b16 %v727
    %v799 = vunpack.c.l.b16 %v728
    %v800 = vunpack.c.l.b16 %v729
    %v801 = vunpack.c.l.b16 %v730
    %v802 = vunpack.c.l.b16 %v731
    %v803 = vunpack.c.l.b16 %v732
    %v804 = vunpack.c.l.b16 %v733
    %v805 = vunpack.c.l.b16 %v734
    %v806 = vunpack.c.l.b16 %v735
    %v807 = vunpack.c.l.b16 %v736
    %v808 = vunpack.c.l.b16 %v737
    %v809 = vunpack.c.l.b16 %v738
    %v810 = vunpack.c.l.b16 %v739
    %v811 = vunpack.c.l.b16 %v740
    %v812 = vunpack.c.l.b16 %v741
    %v813 = vunpack.c.l.b16 %v742
    %v814 = vunpack.c.l.b16 %v743
    %v815 = vunpack.c.l.b16 %v744
    %v816 = vunpack.c.l.b16 %v745
    %v817 = vunpack.c.l.b16 %v746
    %v818 = vunpack.c.l.b16 %v747
    %v819 = vunpack.c.l.b16 %v748
    %v820 = vunpack.c.l.b16 %v749
    %v821 = vunpack.c.l.b16 %v750
    %v822 = vunpack.c.l.b16 %v751
    %v823 = vunpack.c.l.b16 %v752
    %v824 = vunpack.c.l.b16 %v753
    %v825 = vpack.c.b16 %v794, %v793
    %v826 = vpack.c.b16 %v796, %v795
    %v827 = vpack.c.b16 %v798, %v797
    %v828 = vpack.c.b16 %v800, %v799
    %v829 = vpack.c.b16 %v802, %v801
    %v830 = vpack.c.b16 %v804, %v803
    %v831 = vpack.c.b16 %v806, %v805
    %v832 = vpack.c.b16 %v808, %v807
    %v833 = vpack.c.b16 %v810, %v809
    %v834 = vpack.c.b16 %v812, %v811
    %v835 = vpack.c.b16 %v814, %v813
    %v836 = vpack.c.b16 %v816, %v815
    %v837 = vpack.c.b16 %v818, %v817
    %v838 = vpack.c.b16 %v820, %v819
    %v839 = vpack.c.b16 %v822, %v821
    %v840 = vpack.c.b16 %v824, %v823
    %857 = vmatprep.subr.bf16.mxu0 0
    %858 = vmatpush1.bf16.msra.mxu0 %v832
    %859 = vmatprep.subr.bf16.mxu0 0
    %860 = vmatpush1.bf16.msra.mxu0 %v831
    %861 = vmatprep.subr.bf16.mxu0 0
    %862 = vmatpush1.bf16.msra.mxu0 %v830
    %863 = vmatprep.subr.bf16.mxu0 0
    %864 = vmatpush1.bf16.msra.mxu0 %v829
    %865 = vmatprep.subr.bf16.mxu0 0
    %866 = vmatpush1.bf16.msra.mxu0 %v828
    %867 = vmatprep.subr.bf16.mxu0 0
    %868 = vmatpush1.bf16.msra.mxu0 %v827
    %869 = vmatprep.subr.bf16.mxu0 0
    %870 = vmatpush1.bf16.msra.mxu0 %v826
    %871 = vmatprep.subr.bf16.mxu0 0
    %872 = vmatpush1.bf16.msra.mxu0 %v825
    %873 = vmatprep.subr.bf16.mxu0 0
    %874 = vmatpush2.bf16.msra.mxu0 %v840
    %875 = vmatprep.subr.bf16.mxu0 0
    %876 = vmatpush2.bf16.msra.mxu0 %v839
    %877 = vmatprep.subr.bf16.mxu0 0
    %878 = vmatpush2.bf16.msra.mxu0 %v838
    %879 = vmatprep.subr.bf16.mxu0 0
    %880 = vmatpush2.bf16.msra.mxu0 %v837
    %881 = vmatprep.subr.bf16.mxu0 0
    %882 = vmatpush2.bf16.msra.mxu0 %v836
    %883 = vmatprep.subr.bf16.mxu0 0
    %884 = vmatpush2.bf16.msra.mxu0 %v835
    %885 = vmatprep.subr.bf16.mxu0 0
    %886 = vmatpush2.bf16.msra.mxu0 %v834
    %887 = vmatprep.subr.bf16.mxu0 0
    %888 = vmatpush2.bf16.msra.mxu0 %v833
    %889 = vmatprep.mubr.bf16.mxu0 %v721
    %890 = vmatmul.mubr.bf16.gmra.mxu0 %v720
    %v891 = vpop.f32.mrf.mxu0
    %v892 = vadd.f32 %v759, %v891
    %v893 = vpop.f32.mrf.mxu0
    %v894 = vpop.f32.mrf.mxu0
    %v895 = vadd.f32 %v759, %v894
    %v896 = vpop.f32.mrf.mxu0
    %897 = vdwg.mxu0
    %v898 = vmax.f32 %v892, 0.0
    %v899 = vmax.f32 %v895, 0.0
    %v900 = vpack.c.bf16 %v899, %v898
    %v901 = vld [vmem:[%s5] sm:$0xf]
    %v902 = vld [vmem:[%s5 + $0x4] sm:$0xf]
    %v903 = vld [vmem:[%s5 + $0x8] sm:$0xf]
    %v904 = vld [vmem:[%s5 + $0xc] sm:$0xf]
    %v905 = vld [vmem:[%s5 + $0x10] sm:$0xf]
    %v906 = vld [vmem:[%s5 + $0x14] sm:$0xf]
    %v907 = vld [vmem:[%s5 + $0x18] sm:$0xf]
    %v908 = vld [vmem:[%s5 + $0x1c] sm:$0xf]
    %v909 = vld [vmem:[%s5 + $0x20] sm:$0xf]
    %v910 = vld [vmem:[%s5 + $0x24] sm:$0xf]
    %v911 = vld [vmem:[%s5 + $0x28] sm:$0xf]
    %v912 = vld [vmem:[%s5 + $0x2c] sm:$0xf]
    %v913 = vld [vmem:[%s5 + $0x30] sm:$0xf]
    %v914 = vld [vmem:[%s5 + $0x34] sm:$0xf]
    %v915 = vld [vmem:[%s5 + $0x38] sm:$0xf]
    %v916 = vld [vmem:[%s5 + $0x3c] sm:$0xf]
    %v917 = vld [vmem:[%s6] sm:$0x1]
    %v919 = vlaneseq
    %v920 = vshrl.u32 %v919, 7
    %v921 = vsub.s32 0, %v920
    %v922 = vrot.slane %v917, %v921
    %v940 = vunpack.c.l.b16 %v901
    %v941 = vunpack.c.l.b16 %v902
    %v942 = vunpack.c.l.b16 %v903
    %v943 = vunpack.c.l.b16 %v904
    %v944 = vunpack.c.l.b16 %v905
    %v945 = vunpack.c.l.b16 %v906
    %v946 = vunpack.c.l.b16 %v907
    %v947 = vunpack.c.l.b16 %v908
    %v948 = vunpack.c.l.b16 %v909
    %v949 = vunpack.c.l.b16 %v910
    %v950 = vunpack.c.l.b16 %v911
    %v951 = vunpack.c.l.b16 %v912
    %v952 = vunpack.c.l.b16 %v913
    %v953 = vunpack.c.l.b16 %v914
    %v954 = vunpack.c.l.b16 %v915
    %v955 = vunpack.c.l.b16 %v916
    %v956 = vpack.c.b16 %v941, %v940
    %v957 = vpack.c.b16 %v943, %v942
    %v958 = vpack.c.b16 %v945, %v944
    %v959 = vpack.c.b16 %v947, %v946
    %v960 = vpack.c.b16 %v949, %v948
    %v961 = vpack.c.b16 %v951, %v950
    %v962 = vpack.c.b16 %v953, %v952
    %v963 = vpack.c.b16 %v955, %v954
    %972 = vmatprep.subr.bf16.mxu0 0
    %973 = vmatpush1.bf16.msra.mxu0 %v963
    %974 = vmatprep.subr.bf16.mxu0 0
    %975 = vmatpush1.bf16.msra.mxu0 %v962
    %976 = vmatprep.subr.bf16.mxu0 0
    %977 = vmatpush1.bf16.msra.mxu0 %v961
    %978 = vmatprep.subr.bf16.mxu0 0
    %979 = vmatpush1.bf16.msra.mxu0 %v960
    %980 = vmatprep.subr.bf16.mxu0 0
    %981 = vmatpush1.bf16.msra.mxu0 %v959
    %982 = vmatprep.subr.bf16.mxu0 0
    %983 = vmatpush1.bf16.msra.mxu0 %v958
    %984 = vmatprep.subr.bf16.mxu0 0
    %985 = vmatpush1.bf16.msra.mxu0 %v957
    %986 = vmatprep.subr.bf16.mxu0 0
    %987 = vmatpush1.bf16.msra.mxu0 %v956
    %988 = vmatprep.subr.bf16.mxu0 0
    %989 = vmatpush2.bf16.msra.mxu0 0
    %990 = vmatprep.subr.bf16.mxu0 0
    %991 = vmatpush2.bf16.msra.mxu0 0
    %992 = vmatprep.subr.bf16.mxu0 0
    %993 = vmatpush2.bf16.msra.mxu0 0
    %994 = vmatprep.subr.bf16.mxu0 0
    %995 = vmatpush2.bf16.msra.mxu0 0
    %996 = vmatprep.subr.bf16.mxu0 0
    %997 = vmatpush2.bf16.msra.mxu0 0
    %998 = vmatprep.subr.bf16.mxu0 0
    %999 = vmatpush2.bf16.msra.mxu0 0
    %1000 = vmatprep.subr.bf16.mxu0 0
    %1001 = vmatpush2.bf16.msra.mxu0 0
    %1002 = vmatprep.subr.bf16.mxu0 0
    %1003 = vmatpush2.bf16.msra.mxu0 0
    %1004 = vmatprep.mubr.bf16.mxu0 0
    %1005 = vmatmul.mubr.bf16.gmra.mxu0 %v900
    %v1006 = vpop.f32.mrf.mxu0
    %v1007 = vadd.f32 %v922, %v1006
    %v1008 = vpop.f32.mrf.mxu0
    %v1009 = vpop.f32.mrf.mxu0
    %v1010 = vadd.f32 %v922, %v1009
    %v1011 = vpop.f32.mrf.mxu0
    %1012 = vdwg.mxu0
    %v1013 = vmax.f32 %v1007, 0.0
    %v1014 = vmax.f32 %v1010, 0.0
    %v1015 = vld [vmem:[%s7] sm:$0x1]
    %v1016 = vunpack.c.l.bf16 %v1015
    %v1017 = vlaneseq
    %v1018 = vshrl.u32 %v1017, 7
    %v1019 = vsub.s32 0, %v1018
    %v1020 = vrot.slane %v1016, %v1019
    %v1021 = vmul.f32 %v1013, %v1020
    %v1022 = vmul.f32 %v1014, %v1020
    %vm1023 = vcmask 523264
    %v1024 = vsel %vm1023, %v1021, 0.0
    %1025 = vadd.xlane.f32.xlu0 %v1024
    %v1026 = vpop.xlane.xlu0 %1025
    %v1027 = vsel %vm1023, %v1022, 0.0
    %1028 = vadd.xlane.f32.xlu0 %v1027
    %v1029 = vpop.xlane.xlu0 %1028
    %v1030 = vld [vmem:[#allocation2] sm:$0x1]
    %v1032 = vlaneseq
    %v1033 = vshrl.u32 %v1032, 7
    %v1034 = vsub.s32 0, %v1033
    %v1035 = vrot.slane %v1030, %v1034
    %v1037 = vadd.f32 %v1026, %v1035
    %v1038 = vadd.f32 %v1029, %v1035
    %vm1039 = vcmask 7168
    %1040 = vst.msk [vmem:[%s9] sm:$0xff] %vm1039, %v1037
    %1041 = vst.msk [vmem:[%s9 + $0x8] sm:$0xff] %vm1039, %v1038
    // Predicated region
    $region46: #{tpu_custom_call.1} parent=1 // pred_check
      _
    $region47: #{tpu_custom_call.1} parent=1 // pred_check_branch
      %1043 = sbr.rel (0) target = $region49
    $region48: #{tpu_custom_call.1} parent=1 // pred_region
      _
    $region49: #{tpu_custom_call.1} parent=1 // pred_fallthru
      _
    // Predicated region
    $region50: #{tpu_custom_call.1} parent=1 // pred_check
      _
    $region51: #{tpu_custom_call.1} parent=1 // pred_check_branch
      %1045 = sbr.rel (0) target = $region53
    $region52: #{tpu_custom_call.1} parent=1 // pred_region
      _
    $region53: #{tpu_custom_call.1} parent=1 // pred_fallthru
      _
    %1046 = vsyncpa [#allocation4], 1
    %1047 = vsyncpa [#allocation6], 1

</llo_original>
